<compile_context>
chip_gen: v5e
topology: v5e:2x2
jax: 0.10.0
libtpu: 0.0.40
codegen_flags: <defaults>
</compile_context>

<pallas_src>
import functools

import jax
import jax.numpy as jnp
from jax.experimental import pallas as pl
from jax.experimental.pallas import tpu as pltpu


# Safe scoped-VMEM request across v5e (128 MiB), v6e (128 MiB), v7x (64 MiB).
_VMEM_LIMIT = 32 * 1024 * 1024


def _pick_tile(dim, target, align):
    """Largest multiple of `align` that divides `dim` and is <= `target`.

    Falls back to the full dimension (always a legal block size). Guarantees the
    (8,128) BlockSpec constraint: returned tile is either a multiple of `align`
    or equal to the full array dimension.
    """
    if dim <= target:
        return dim
    t = (target // align) * align
    while t >= align:
        if dim % t == 0:
            return t
        t -= align
    return dim


# ----------------------------- linear (Conv1D) -------------------------------

def _linear_kernel(x_ref, w_ref, b_ref, o_ref, acc_ref):
    k = pl.program_id(2)

    @pl.when(k == 0)
    def _():
        acc_ref[...] = jnp.zeros_like(acc_ref)

    acc_ref[...] += jnp.dot(x_ref[...], w_ref[...],
                            preferred_element_type=jnp.float32)

    @pl.when(k == pl.num_programs(2) - 1)
    def _():
        # single wide store per output tile (bias added at finalize)
        o_ref[...] = (acc_ref[...] + b_ref[...]).astype(o_ref.dtype)


def pallas_linear(x, w, b, *, tm_target=256, tn_target=512, tk_target=512):
    """GPT2 "Conv1D": y = x @ W + b.   x: (M, K), w: (K, N), b: (N,)."""
    M, K = x.shape
    K2, N = w.shape
    assert K == K2
    tm = _pick_tile(M, tm_target, 8)
    tn = _pick_tile(N, tn_target, 128)
    tk = _pick_tile(K, tk_target, 128)
    grid = (M // tm, N // tn, K // tk)

    cost = pl.CostEstimate(
        flops=2 * M * N * K,
        transcendentals=0,
        bytes_accessed=4 * (M * K + K * N + M * N + N),
    )

    return pl.pallas_call(
        _linear_kernel,
        out_shape=jax.ShapeDtypeStruct((M, N), jnp.float32),
        grid=grid,
        in_specs=[
            pl.BlockSpec((tm, tk), lambda i, j, k: (i, k)),
            pl.BlockSpec((tk, tn), lambda i, j, k: (k, j)),
            pl.BlockSpec((1, tn), lambda i, j, k: (0, j)),
        ],
        out_specs=pl.BlockSpec((tm, tn), lambda i, j, k: (i, j)),
        scratch_shapes=[pltpu.VMEM((tm, tn), jnp.float32)],
        compiler_params=pltpu.CompilerParams(
            dimension_semantics=("parallel", "parallel", "arbitrary"),
            vmem_limit_bytes=_VMEM_LIMIT,
        ),
        cost_estimate=cost,
    )(x, w, b.reshape(1, N))


# --------------------------- flash causal attention ---------------------------

def _flash_attn_kernel(q_ref, k_ref, v_ref, o_ref, m_sc, l_sc, acc_sc,
                       *, scale, tq, tk):
    qi = pl.program_id(2)
    ki = pl.program_id(3)

    @pl.when(ki == 0)
    def _():
        m_sc[...] = jnp.full_like(m_sc, -jnp.inf)
        l_sc[...] = jnp.zeros_like(l_sc)
        acc_sc[...] = jnp.zeros_like(acc_sc)

    # Skip k/v tiles that lie entirely above the causal diagonal.
    @pl.when(ki * tk <= qi * tq + (tq - 1))
    def _():
        q = q_ref[0, 0] * scale                      # (tq, D), scale folded into q
        k = k_ref[0, 0]                              # (tk, D)
        v = v_ref[0, 0]                              # (tk, D)

        # q @ k^T contracting last dims directly (no explicit transpose of K).
        s = jax.lax.dot_general(q, k, (((1,), (1,)), ((), ())),
                                preferred_element_type=jnp.float32)  # (tq, tk)

        row = qi * tq + jax.lax.broadcasted_iota(jnp.int32, (tq, tk), 0)
        col = ki * tk + jax.lax.broadcasted_iota(jnp.int32, (tq, tk), 1)
        s = jnp.where(col <= row, s, jnp.finfo(jnp.float32).min)

        m_prev = m_sc[...]
        m_new = jnp.maximum(m_prev, jnp.max(s, axis=-1, keepdims=True))
        alpha = jnp.exp(m_prev - m_new)
        p = jnp.exp(s - m_new)
        l_sc[...] = alpha * l_sc[...] + jnp.sum(p, axis=-1, keepdims=True)
        acc_sc[...] = alpha * acc_sc[...] + jnp.dot(
            p.astype(v.dtype), v, preferred_element_type=jnp.float32)
        m_sc[...] = m_new

    # Single full-width store per output tile, at the last k step (store-slot
    # friendly, esp. on v5e).
    @pl.when(ki == pl.num_programs(3) - 1)
    def _():
        o_ref[0, 0] = (acc_sc[...] *
                       pl.reciprocal(l_sc[...], approx=True)).astype(o_ref.dtype)


def pallas_causal_attention(q, k, v, *, tq_target=256, tk_target=256):
    """q, k, v: (B, H, T, D) f32 -> causal softmax attention output (B, H, T, D)."""
    B, H, T, D = q.shape
    tq = _pick_tile(T, tq_target, 128)
    tk = _pick_tile(T, tk_target, 128)
    nq, nk = T // tq, T // tk
    scale = 1.0 / float(D) ** 0.5

    q_spec = pl.BlockSpec((1, 1, tq, D), lambda b, h, qi, ki: (b, h, qi, 0))
    kv_spec = pl.BlockSpec((1, 1, tk, D), lambda b, h, qi, ki: (b, h, ki, 0))
    o_spec = pl.BlockSpec((1, 1, tq, D), lambda b, h, qi, ki: (b, h, qi, 0))

    cost = pl.CostEstimate(
        flops=4 * B * H * T * T * D,
        transcendentals=B * H * T * T,
        bytes_accessed=4 * 4 * B * H * T * D,
    )

    kernel = functools.partial(_flash_attn_kernel, scale=scale, tq=tq, tk=tk)
    return pl.pallas_call(
        kernel,
        out_shape=jax.ShapeDtypeStruct((B, H, T, D), jnp.float32),
        grid=(B, H, nq, nk),
        in_specs=[q_spec, kv_spec, kv_spec],
        out_specs=o_spec,
        scratch_shapes=[
            pltpu.VMEM((tq, 1), jnp.float32),   # running max
            pltpu.VMEM((tq, 1), jnp.float32),   # running sum
            pltpu.VMEM((tq, D), jnp.float32),   # output accumulator
        ],
        compiler_params=pltpu.CompilerParams(
            dimension_semantics=("parallel", "parallel", "parallel", "arbitrary"),
            vmem_limit_bytes=_VMEM_LIMIT,
        ),
        cost_estimate=cost,
    )(q, k, v)


# --------------------------------- forward -----------------------------------

def gpt2_attention_forward(hidden_states, c_attn_w, c_attn_b,
                           c_proj_w, c_proj_b, num_heads):
    """GPT2Attention.forward (world_size == 1, no cache, no extra masks)."""
    B, T, E = hidden_states.shape
    D = E // num_heads

    # c_attn: fused qkv projection, (B*T, E) @ (E, 3E) + b
    x2d = hidden_states.reshape(B * T, E)
    qkv = pallas_linear(x2d, c_attn_w, c_attn_b)               # (B*T, 3E)

    # split qkv + _split_heads -> (3, B, H, T, D)
    # TODO(synk): fold the head split/merge into BlockSpec index maps once
    # head_dim is lane-aligned (>=128); at D<128 per-head lane-dim slices
    # violate the (8,128) block constraint, so these relayouts stay in XLA.
    qkv = qkv.reshape(B, T, 3, num_heads, D).transpose(2, 0, 3, 1, 4)
    qh, kh, vh = qkv[0], qkv[1], qkv[2]

    attn = pallas_causal_attention(qh, kh, vh)                 # (B, H, T, D)

    # _merge_heads -> (B*T, E)
    attn = attn.transpose(0, 2, 1, 3).reshape(B * T, E)

    # c_proj; reduce-scatter & resid_dropout are identity at world_size=1 / eval.
    return pallas_linear(attn, c_proj_w, c_proj_b).reshape(B, T, E)


# ------------------------------- reference ------------------------------------

def reference_forward(hidden_states, c_attn_w, c_attn_b, c_proj_w, c_proj_b,
                      num_heads):
    B, T, E = hidden_states.shape
    D = E // num_heads
    qkv = hidden_states @ c_attn_w + c_attn_b
    q, k, v = jnp.split(qkv, 3, axis=-1)
    sh = lambda t: t.reshape(B, T, num_heads, D).transpose(0, 2, 1, 3)
    q, k, v = sh(q), sh(k), sh(v)
    s = jnp.einsum("bhqd,bhkd->bhqk", q, k) / (D ** 0.5)
    causal = jnp.tril(jnp.ones((T, T), dtype=bool))
    s = jnp.where(causal, s, jnp.finfo(s.dtype).min)
    p = jax.nn.softmax(s, axis=-1)
    o = jnp.einsum("bhqk,bhkd->bhqd", p, v)
    o = o.transpose(0, 2, 1, 3).reshape(B, T, E)
    return o @ c_proj_w + c_proj_b


# ---------------------------------- main ---------------------------------------

if __name__ == "__main__":
    B, T, E, H = 2, 8, 32, 4      # batch, seq, embed_dim, num_heads (head_dim=8)

    key = jax.random.PRNGKey(0)
    k1, k2, k3, k4, k5 = jax.random.split(key, 5)

    hidden_states = jax.random.normal(k1, (B, T, E), dtype=jnp.float32)
    # GPT2 Conv1D parameters: weight (in, out) ~ N(0, 0.02).
    c_attn_w = 0.02 * jax.random.normal(k2, (E, 3 * E), dtype=jnp.float32)
    c_attn_b = 0.02 * jax.random.normal(k4, (3 * E,), dtype=jnp.float32)
    c_proj_w = 0.02 * jax.random.normal(k3, (E, E), dtype=jnp.float32)
    c_proj_b = 0.02 * jax.random.normal(k5, (E,), dtype=jnp.float32)

    fwd = jax.jit(gpt2_attention_forward, static_argnums=5)
    out = jax.block_until_ready(fwd(hidden_states, c_attn_w, c_attn_b,
                                    c_proj_w, c_proj_b, H))

    ref = reference_forward(hidden_states, c_attn_w, c_attn_b,
                            c_proj_w, c_proj_b, H)
    assert out.shape == (B, T, E)
    assert jnp.allclose(out, ref, atol=1e-3, rtol=1e-3), \
        float(jnp.max(jnp.abs(out - ref)))

    print("KERNEL_OK")
</pallas_src>

<mosaic_0001>
module attributes {stable_mosaic.version = 11 : i64} {
  func.func @_flash_attn_kernel(%arg0: i32, %arg1: i32, %arg2: i32, %arg3: i32, %arg4: memref<1x1x8x8xf32, #tpu.memory_space<vmem>>, %arg5: memref<1x1x8x8xf32, #tpu.memory_space<vmem>>, %arg6: memref<1x1x8x8xf32, #tpu.memory_space<vmem>>, %arg7: memref<1x1x8x8xf32, #tpu.memory_space<vmem>>, %arg8: memref<8x1xf32, #tpu.memory_space<vmem>>, %arg9: memref<8x1xf32, #tpu.memory_space<vmem>>, %arg10: memref<8x8xf32, #tpu.memory_space<vmem>>) attributes {dimension_semantics = [#tpu.dimension_semantics<parallel>, #tpu.dimension_semantics<parallel>, #tpu.dimension_semantics<parallel>, #tpu.dimension_semantics<arbitrary>], iteration_bounds = array<i64: 2, 4, 1, 1>, scalar_prefetch = 0 : i64, scratch_operands = 3 : i64, tpu.core_type = #tpu.core_type<tc>, window_params = [{transform_indices = @transform_0, window_bounds = array<i64: 1, 1, 8, 8>}, {transform_indices = @transform_1, window_bounds = array<i64: 1, 1, 8, 8>}, {transform_indices = @transform_2, window_bounds = array<i64: 1, 1, 8, 8>}, {transform_indices = @transform_3, window_bounds = array<i64: 1, 1, 8, 8>}]} {
    %c0_i32 = arith.constant 0 : i32
    %0 = arith.cmpi eq, %arg3, %c0_i32 : i32
    %1 = arith.extui %0 : i1 to i32
    %c0_i32_0 = arith.constant 0 : i32
    %2 = arith.cmpi ne, %1, %c0_i32_0 : i32
    scf.if %2 {
      %cst = arith.constant 0xFF800000 : f32
      %12 = vector.broadcast %cst : f32 to vector<8x1xf32>
      %c0 = arith.constant 0 : index
      %c0_5 = arith.constant 0 : index
      %13 = vector.load %arg8[%c0, %c0_5] : memref<8x1xf32, #tpu.memory_space<vmem>>, vector<8x1xf32>
      tpu.vector_store %arg8[%c0, %c0_5], %12 {strides = array<i32>} : memref<8x1xf32, #tpu.memory_space<vmem>>, vector<8x1xf32>,
      %cst_6 = arith.constant 0.000000e+00 : f32
      %14 = vector.broadcast %cst_6 : f32 to vector<8x1xf32>
      %c0_7 = arith.constant 0 : index
      %c0_8 = arith.constant 0 : index
      %15 = vector.load %arg9[%c0_7, %c0_8] : memref<8x1xf32, #tpu.memory_space<vmem>>, vector<8x1xf32>
      tpu.vector_store %arg9[%c0_7, %c0_8], %14 {strides = array<i32>} : memref<8x1xf32, #tpu.memory_space<vmem>>, vector<8x1xf32>,
      %cst_9 = arith.constant 0.000000e+00 : f32
      %16 = vector.broadcast %cst_9 : f32 to vector<8x8xf32>
      %c0_10 = arith.constant 0 : index
      %c0_11 = arith.constant 0 : index
      %17 = vector.load %arg10[%c0_10, %c0_11] : memref<8x8xf32, #tpu.memory_space<vmem>>, vector<8x8xf32>
      tpu.vector_store %arg10[%c0_10, %c0_11], %16 {strides = array<i32>} : memref<8x8xf32, #tpu.memory_space<vmem>>, vector<8x8xf32>,
    } else {
    }
    %c8_i32 = arith.constant 8 : i32
    %3 = arith.muli %arg3, %c8_i32 : i32
    %c8_i32_1 = arith.constant 8 : i32
    %4 = arith.muli %arg2, %c8_i32_1 : i32
    %c7_i32 = arith.constant 7 : i32
    %5 = arith.addi %4, %c7_i32 : i32
    %6 = arith.cmpi sle, %3, %5 : i32
    %7 = arith.extui %6 : i1 to i32
    %c0_i32_2 = arith.constant 0 : i32
    %8 = arith.cmpi ne, %7, %c0_i32_2 : i32
    scf.if %8 {
      %c0 = arith.constant 0 : index
      %c0_5 = arith.constant 0 : index
      %c0_6 = arith.constant 0 : index
      %c0_7 = arith.constant 0 : index
      %12 = vector.load %arg4[%c0, %c0_5, %c0_6, %c0_7] : memref<1x1x8x8xf32, #tpu.memory_space<vmem>>, vector<1x1x8x8xf32>
      %13 = vector.shape_cast %12 : vector<1x1x8x8xf32> to vector<8x8xf32>
      %cst = arith.constant 0.353553385 : f32
      %14 = vector.broadcast %cst : f32 to vector<8x8xf32>
      %15 = arith.mulf %13, %14 : vector<8x8xf32>
      %c0_8 = arith.constant 0 : index
      %c0_9 = arith.constant 0 : index
      %c0_10 = arith.constant 0 : index
      %c0_11 = arith.constant 0 : index
      %16 = vector.load %arg5[%c0_8, %c0_9, %c0_10, %c0_11] : memref<1x1x8x8xf32, #tpu.memory_space<vmem>>, vector<1x1x8x8xf32>
      %17 = vector.shape_cast %16 : vector<1x1x8x8xf32> to vector<8x8xf32>
      %c0_12 = arith.constant 0 : index
      %c0_13 = arith.constant 0 : index
      %c0_14 = arith.constant 0 : index
      %c0_15 = arith.constant 0 : index
      %18 = vector.load %arg6[%c0_12, %c0_13, %c0_14, %c0_15] : memref<1x1x8x8xf32, #tpu.memory_space<vmem>>, vector<1x1x8x8xf32>
      %19 = vector.shape_cast %18 : vector<1x1x8x8xf32> to vector<8x8xf32>
      %cst_16 = arith.constant dense<0.000000e+00> : vector<8x8xf32>
      %20 = tpu.matmul %15, %17, %cst_16 {dimension_numbers = #tpu.dot_dimension_numbers<[1], [1], [0], [0], [0, 0, 1, 0], [], []>} : vector<8x8xf32>, vector<8x8xf32>, vector<8x8xf32> -> vector<8x8xf32>
      %c8_i32_17 = arith.constant 8 : i32
      %21 = arith.muli %arg2, %c8_i32_17 : i32
      %22 = tpu.iota {dimensions = array<i32: 0>} : vector<8x8xi32>
      %23 = vector.broadcast %21 : i32 to vector<8x8xi32>
      %24 = arith.addi %23, %22 : vector<8x8xi32>
      %c8_i32_18 = arith.constant 8 : i32
      %25 = arith.muli %arg3, %c8_i32_18 : i32
      %26 = tpu.iota {dimensions = array<i32: 1>} : vector<8x8xi32>
      %27 = vector.broadcast %25 : i32 to vector<8x8xi32>
      %28 = arith.addi %27, %26 : vector<8x8xi32>
      %29 = arith.cmpi sle, %28, %24 : vector<8x8xi32>
      %cst_19 = arith.constant -3.40282347E+38 : f32
      %30 = vector.broadcast %cst_19 : f32 to vector<8x8xf32>
      %31 = arith.select %29, %20, %30 : vector<8x8xi1>, vector<8x8xf32>
      %c0_20 = arith.constant 0 : index
      %c0_21 = arith.constant 0 : index
      %32 = vector.load %arg8[%c0_20, %c0_21] : memref<8x1xf32, #tpu.memory_space<vmem>>, vector<8x1xf32>
      %cst_22 = arith.constant dense<0xFF800000> : vector<8xf32>
      %33 = vector.multi_reduction <maximumf>, %31, %cst_22 [1] : vector<8x8xf32> to vector<8xf32>
      %34 = vector.shape_cast %33 : vector<8xf32> to vector<8x1xf32>
      %35 = arith.maximumf %32, %34 : vector<8x1xf32>
      %36 = arith.subf %32, %35 : vector<8x1xf32>
      %37 = math.exp %36 : vector<8x1xf32>
      %38 = vector.broadcast %35 : vector<8x1xf32> to vector<8x8xf32>
      %39 = arith.subf %31, %38 : vector<8x8xf32>
      %40 = math.exp %39 : vector<8x8xf32>
      %c0_23 = arith.constant 0 : index
      %c0_24 = arith.constant 0 : index
      %41 = vector.load %arg9[%c0_23, %c0_24] : memref<8x1xf32, #tpu.memory_space<vmem>>, vector<8x1xf32>
      %42 = arith.mulf %37, %41 : vector<8x1xf32>
      %cst_25 = arith.constant dense<0.000000e+00> : vector<8xf32>
      %43 = vector.multi_reduction <add>, %40, %cst_25 [1] : vector<8x8xf32> to vector<8xf32>
      %44 = vector.shape_cast %43 : vector<8xf32> to vector<8x1xf32>
      %45 = arith.addf %42, %44 : vector<8x1xf32>
      %c0_26 = arith.constant 0 : index
      %c0_27 = arith.constant 0 : index
      %46 = vector.load %arg9[%c0_26, %c0_27] : memref<8x1xf32, #tpu.memory_space<vmem>>, vector<8x1xf32>
      tpu.vector_store %arg9[%c0_26, %c0_27], %45 {strides = array<i32>} : memref<8x1xf32, #tpu.memory_space<vmem>>, vector<8x1xf32>,
      %c0_28 = arith.constant 0 : index
      %c0_29 = arith.constant 0 : index
      %47 = vector.load %arg10[%c0_28, %c0_29] : memref<8x8xf32, #tpu.memory_space<vmem>>, vector<8x8xf32>
      %48 = vector.broadcast %37 : vector<8x1xf32> to vector<8x8xf32>
      %49 = arith.mulf %48, %47 : vector<8x8xf32>
      %cst_30 = arith.constant dense<0.000000e+00> : vector<8x8xf32>
      %50 = tpu.matmul %40, %19, %cst_30 {dimension_numbers = #tpu.dot_dimension_numbers<[1], [0], [0], [1], [0, 0, 1, 1], [], []>} : vector<8x8xf32>, vector<8x8xf32>, vector<8x8xf32> -> vector<8x8xf32>
      %51 = arith.addf %49, %50 : vector<8x8xf32>
      %c0_31 = arith.constant 0 : index
      %c0_32 = arith.constant 0 : index
      %52 = vector.load %arg10[%c0_31, %c0_32] : memref<8x8xf32, #tpu.memory_space<vmem>>, vector<8x8xf32>
      tpu.vector_store %arg10[%c0_31, %c0_32], %51 {strides = array<i32>} : memref<8x8xf32, #tpu.memory_space<vmem>>, vector<8x8xf32>,
      %c0_33 = arith.constant 0 : index
      %c0_34 = arith.constant 0 : index
      %53 = vector.load %arg8[%c0_33, %c0_34] : memref<8x1xf32, #tpu.memory_space<vmem>>, vector<8x1xf32>
      tpu.vector_store %arg8[%c0_33, %c0_34], %35 {strides = array<i32>} : memref<8x1xf32, #tpu.memory_space<vmem>>, vector<8x1xf32>,
    } else {
    }
    %c0_i32_3 = arith.constant 0 : i32
    %9 = arith.cmpi eq, %arg3, %c0_i32_3 : i32
    %10 = arith.extui %9 : i1 to i32
    %c0_i32_4 = arith.constant 0 : i32
    %11 = arith.cmpi ne, %10, %c0_i32_4 : i32
    scf.if %11 {
      %c0 = arith.constant 0 : index
      %c0_5 = arith.constant 0 : index
      %12 = vector.load %arg10[%c0, %c0_5] : memref<8x8xf32, #tpu.memory_space<vmem>>, vector<8x8xf32>
      %c0_6 = arith.constant 0 : index
      %c0_7 = arith.constant 0 : index
      %13 = vector.load %arg9[%c0_6, %c0_7] : memref<8x1xf32, #tpu.memory_space<vmem>>, vector<8x1xf32>
      %14 = tpu.reciprocal %13 {approx = true} : vector<8x1xf32> -> vector<8x1xf32>
      %15 = vector.broadcast %14 : vector<8x1xf32> to vector<8x8xf32>
      %16 = arith.mulf %12, %15 : vector<8x8xf32>
      %c0_8 = arith.constant 0 : index
      %c0_9 = arith.constant 0 : index
      %c0_10 = arith.constant 0 : index
      %c0_11 = arith.constant 0 : index
      %17 = vector.load %arg7[%c0_8, %c0_9, %c0_10, %c0_11] : memref<1x1x8x8xf32, #tpu.memory_space<vmem>>, vector<1x1x8x8xf32>
      %18 = vector.shape_cast %17 : vector<1x1x8x8xf32> to vector<8x8xf32>
      %19 = vector.shape_cast %16 : vector<8x8xf32> to vector<1x1x8x8xf32>
      tpu.vector_store %arg7[%c0_8, %c0_9, %c0_10, %c0_11], %19 {strides = array<i32>} : memref<1x1x8x8xf32, #tpu.memory_space<vmem>>, vector<1x1x8x8xf32>,
    } else {
    }
    return
  }
  func.func @transform_0(%arg0: i32, %arg1: i32, %arg2: i32, %arg3: i32) -> (i32, i32, i32, i32) {
    %c0_i32 = arith.constant 0 : i32
    %c0_i32_0 = arith.constant 0 : i32
    return %arg0, %arg1, %arg2, %c0_i32 : i32, i32, i32, i32
  }
  func.func @transform_1(%arg0: i32, %arg1: i32, %arg2: i32, %arg3: i32) -> (i32, i32, i32, i32) {
    %c0_i32 = arith.constant 0 : i32
    %c0_i32_0 = arith.constant 0 : i32
    return %arg0, %arg1, %arg3, %c0_i32 : i32, i32, i32, i32
  }
  func.func @transform_2(%arg0: i32, %arg1: i32, %arg2: i32, %arg3: i32) -> (i32, i32, i32, i32) {
    %c0_i32 = arith.constant 0 : i32
    %c0_i32_0 = arith.constant 0 : i32
    return %arg0, %arg1, %arg3, %c0_i32 : i32, i32, i32, i32
  }
  func.func @transform_3(%arg0: i32, %arg1: i32, %arg2: i32, %arg3: i32) -> (i32, i32, i32, i32) {
    %c0_i32 = arith.constant 0 : i32
    %c0_i32_0 = arith.constant 0 : i32
    return %arg0, %arg1, %arg2, %c0_i32 : i32, i32, i32, i32
  }
}

module attributes {stable_mosaic.version = 11 : i64} {
  func.func @_linear_kernel(%arg0: i32, %arg1: i32, %arg2: i32, %arg3: memref<16x32xf32, #tpu.memory_space<vmem>>, %arg4: memref<32x96xf32, #tpu.memory_space<vmem>>, %arg5: memref<1x96xf32, #tpu.memory_space<vmem>>, %arg6: memref<16x96xf32, #tpu.memory_space<vmem>>, %arg7: memref<16x96xf32, #tpu.memory_space<vmem>>) attributes {dimension_semantics = [#tpu.dimension_semantics<parallel>, #tpu.dimension_semantics<parallel>, #tpu.dimension_semantics<arbitrary>], iteration_bounds = array<i64: 1, 1, 1>, scalar_prefetch = 0 : i64, scratch_operands = 1 : i64, tpu.core_type = #tpu.core_type<tc>, window_params = [{transform_indices = @transform_0, window_bounds = array<i64: 16, 32>}, {transform_indices = @transform_1, window_bounds = array<i64: 32, 96>}, {transform_indices = @transform_2, window_bounds = array<i64: 1, 96>}, {transform_indices = @transform_3, window_bounds = array<i64: 16, 96>}]} {
    %c0_i32 = arith.constant 0 : i32
    %0 = arith.cmpi eq, %arg2, %c0_i32 : i32
    %1 = arith.extui %0 : i1 to i32
    %c0_i32_0 = arith.constant 0 : i32
    %2 = arith.cmpi ne, %1, %c0_i32_0 : i32
    scf.if %2 {
      %cst_10 = arith.constant 0.000000e+00 : f32
      %12 = vector.broadcast %cst_10 : f32 to vector<16x96xf32>
      %c0_11 = arith.constant 0 : index
      %c0_12 = arith.constant 0 : index
      %13 = vector.load %arg7[%c0_11, %c0_12] : memref<16x96xf32, #tpu.memory_space<vmem>>, vector<16x96xf32>
      tpu.vector_store %arg7[%c0_11, %c0_12], %12 {strides = array<i32>} : memref<16x96xf32, #tpu.memory_space<vmem>>, vector<16x96xf32>,
    } else {
    }
    %c0 = arith.constant 0 : index
    %c0_1 = arith.constant 0 : index
    %3 = vector.load %arg7[%c0, %c0_1] : memref<16x96xf32, #tpu.memory_space<vmem>>, vector<16x96xf32>
    %c0_2 = arith.constant 0 : index
    %c0_3 = arith.constant 0 : index
    %4 = vector.load %arg3[%c0_2, %c0_3] : memref<16x32xf32, #tpu.memory_space<vmem>>, vector<16x32xf32>
    %c0_4 = arith.constant 0 : index
    %c0_5 = arith.constant 0 : index
    %5 = vector.load %arg4[%c0_4, %c0_5] : memref<32x96xf32, #tpu.memory_space<vmem>>, vector<32x96xf32>
    %cst = arith.constant dense<0.000000e+00> : vector<16x96xf32>
    %6 = tpu.matmul %4, %5, %cst {dimension_numbers = #tpu.dot_dimension_numbers<[1], [0], [0], [1], [0, 0, 1, 1], [], []>} : vector<16x32xf32>, vector<32x96xf32>, vector<16x96xf32> -> vector<16x96xf32>
    %7 = arith.addf %3, %6 : vector<16x96xf32>
    %c0_6 = arith.constant 0 : index
    %c0_7 = arith.constant 0 : index
    %8 = vector.load %arg7[%c0_6, %c0_7] : memref<16x96xf32, #tpu.memory_space<vmem>>, vector<16x96xf32>
    tpu.vector_store %arg7[%c0_6, %c0_7], %7 {strides = array<i32>} : memref<16x96xf32, #tpu.memory_space<vmem>>, vector<16x96xf32>,
    %c0_i32_8 = arith.constant 0 : i32
    %9 = arith.cmpi eq, %arg2, %c0_i32_8 : i32
    %10 = arith.extui %9 : i1 to i32
    %c0_i32_9 = arith.constant 0 : i32
    %11 = arith.cmpi ne, %10, %c0_i32_9 : i32
    scf.if %11 {
      %c0_10 = arith.constant 0 : index
      %c0_11 = arith.constant 0 : index
      %12 = vector.load %arg7[%c0_10, %c0_11] : memref<16x96xf32, #tpu.memory_space<vmem>>, vector<16x96xf32>
      %c0_12 = arith.constant 0 : index
      %c0_13 = arith.constant 0 : index
      %13 = vector.load %arg5[%c0_12, %c0_13] : memref<1x96xf32, #tpu.memory_space<vmem>>, vector<1x96xf32>
      %14 = vector.broadcast %13 : vector<1x96xf32> to vector<16x96xf32>
      %15 = arith.addf %12, %14 : vector<16x96xf32>
      %c0_14 = arith.constant 0 : index
      %c0_15 = arith.constant 0 : index
      %16 = vector.load %arg6[%c0_14, %c0_15] : memref<16x96xf32, #tpu.memory_space<vmem>>, vector<16x96xf32>
      tpu.vector_store %arg6[%c0_14, %c0_15], %15 {strides = array<i32>} : memref<16x96xf32, #tpu.memory_space<vmem>>, vector<16x96xf32>,
    } else {
    }
    return
  }
  func.func @transform_0(%arg0: i32, %arg1: i32, %arg2: i32) -> (i32, i32) {
    %c0_i32 = arith.constant 0 : i32
    return %arg0, %arg2 : i32, i32
  }
  func.func @transform_1(%arg0: i32, %arg1: i32, %arg2: i32) -> (i32, i32) {
    %c0_i32 = arith.constant 0 : i32
    return %arg2, %arg1 : i32, i32
  }
  func.func @transform_2(%arg0: i32, %arg1: i32, %arg2: i32) -> (i32, i32) {
    %c0_i32 = arith.constant 0 : i32
    %c0_i32_0 = arith.constant 0 : i32
    return %c0_i32, %arg1 : i32, i32
  }
  func.func @transform_3(%arg0: i32, %arg1: i32, %arg2: i32) -> (i32, i32) {
    %c0_i32 = arith.constant 0 : i32
    return %arg0, %arg1 : i32, i32
  }
}

module attributes {stable_mosaic.version = 11 : i64} {
  func.func @_linear_kernel(%arg0: i32, %arg1: i32, %arg2: i32, %arg3: memref<16x32xf32, #tpu.memory_space<vmem>>, %arg4: memref<32x32xf32, #tpu.memory_space<vmem>>, %arg5: memref<1x32xf32, #tpu.memory_space<vmem>>, %arg6: memref<16x32xf32, #tpu.memory_space<vmem>>, %arg7: memref<16x32xf32, #tpu.memory_space<vmem>>) attributes {dimension_semantics = [#tpu.dimension_semantics<parallel>, #tpu.dimension_semantics<parallel>, #tpu.dimension_semantics<arbitrary>], iteration_bounds = array<i64: 1, 1, 1>, scalar_prefetch = 0 : i64, scratch_operands = 1 : i64, tpu.core_type = #tpu.core_type<tc>, window_params = [{transform_indices = @transform_0, window_bounds = array<i64: 16, 32>}, {transform_indices = @transform_1, window_bounds = array<i64: 32, 32>}, {transform_indices = @transform_2, window_bounds = array<i64: 1, 32>}, {transform_indices = @transform_3, window_bounds = array<i64: 16, 32>}]} {
    %c0_i32 = arith.constant 0 : i32
    %0 = arith.cmpi eq, %arg2, %c0_i32 : i32
    %1 = arith.extui %0 : i1 to i32
    %c0_i32_0 = arith.constant 0 : i32
    %2 = arith.cmpi ne, %1, %c0_i32_0 : i32
    scf.if %2 {
      %cst_10 = arith.constant 0.000000e+00 : f32
      %12 = vector.broadcast %cst_10 : f32 to vector<16x32xf32>
      %c0_11 = arith.constant 0 : index
      %c0_12 = arith.constant 0 : index
      %13 = vector.load %arg7[%c0_11, %c0_12] : memref<16x32xf32, #tpu.memory_space<vmem>>, vector<16x32xf32>
      tpu.vector_store %arg7[%c0_11, %c0_12], %12 {strides = array<i32>} : memref<16x32xf32, #tpu.memory_space<vmem>>, vector<16x32xf32>,
    } else {
    }
    %c0 = arith.constant 0 : index
    %c0_1 = arith.constant 0 : index
    %3 = vector.load %arg7[%c0, %c0_1] : memref<16x32xf32, #tpu.memory_space<vmem>>, vector<16x32xf32>
    %c0_2 = arith.constant 0 : index
    %c0_3 = arith.constant 0 : index
    %4 = vector.load %arg3[%c0_2, %c0_3] : memref<16x32xf32, #tpu.memory_space<vmem>>, vector<16x32xf32>
    %c0_4 = arith.constant 0 : index
    %c0_5 = arith.constant 0 : index
    %5 = vector.load %arg4[%c0_4, %c0_5] : memref<32x32xf32, #tpu.memory_space<vmem>>, vector<32x32xf32>
    %cst = arith.constant dense<0.000000e+00> : vector<16x32xf32>
    %6 = tpu.matmul %4, %5, %cst {dimension_numbers = #tpu.dot_dimension_numbers<[1], [0], [0], [1], [0, 0, 1, 1], [], []>} : vector<16x32xf32>, vector<32x32xf32>, vector<16x32xf32> -> vector<16x32xf32>
    %7 = arith.addf %3, %6 : vector<16x32xf32>
    %c0_6 = arith.constant 0 : index
    %c0_7 = arith.constant 0 : index
    %8 = vector.load %arg7[%c0_6, %c0_7] : memref<16x32xf32, #tpu.memory_space<vmem>>, vector<16x32xf32>
    tpu.vector_store %arg7[%c0_6, %c0_7], %7 {strides = array<i32>} : memref<16x32xf32, #tpu.memory_space<vmem>>, vector<16x32xf32>,
    %c0_i32_8 = arith.constant 0 : i32
    %9 = arith.cmpi eq, %arg2, %c0_i32_8 : i32
    %10 = arith.extui %9 : i1 to i32
    %c0_i32_9 = arith.constant 0 : i32
    %11 = arith.cmpi ne, %10, %c0_i32_9 : i32
    scf.if %11 {
      %c0_10 = arith.constant 0 : index
      %c0_11 = arith.constant 0 : index
      %12 = vector.load %arg7[%c0_10, %c0_11] : memref<16x32xf32, #tpu.memory_space<vmem>>, vector<16x32xf32>
      %c0_12 = arith.constant 0 : index
      %c0_13 = arith.constant 0 : index
      %13 = vector.load %arg5[%c0_12, %c0_13] : memref<1x32xf32, #tpu.memory_space<vmem>>, vector<1x32xf32>
      %14 = vector.broadcast %13 : vector<1x32xf32> to vector<16x32xf32>
      %15 = arith.addf %12, %14 : vector<16x32xf32>
      %c0_14 = arith.constant 0 : index
      %c0_15 = arith.constant 0 : index
      %16 = vector.load %arg6[%c0_14, %c0_15] : memref<16x32xf32, #tpu.memory_space<vmem>>, vector<16x32xf32>
      tpu.vector_store %arg6[%c0_14, %c0_15], %15 {strides = array<i32>} : memref<16x32xf32, #tpu.memory_space<vmem>>, vector<16x32xf32>,
    } else {
    }
    return
  }
  func.func @transform_0(%arg0: i32, %arg1: i32, %arg2: i32) -> (i32, i32) {
    %c0_i32 = arith.constant 0 : i32
    return %arg0, %arg2 : i32, i32
  }
  func.func @transform_1(%arg0: i32, %arg1: i32, %arg2: i32) -> (i32, i32) {
    %c0_i32 = arith.constant 0 : i32
    return %arg2, %arg1 : i32, i32
  }
  func.func @transform_2(%arg0: i32, %arg1: i32, %arg2: i32) -> (i32, i32) {
    %c0_i32 = arith.constant 0 : i32
    %c0_i32_0 = arith.constant 0 : i32
    return %c0_i32, %arg1 : i32, i32
  }
  func.func @transform_3(%arg0: i32, %arg1: i32, %arg2: i32) -> (i32, i32) {
    %c0_i32 = arith.constant 0 : i32
    return %arg0, %arg1 : i32, i32
  }
}

</mosaic_0001>

<llo_original>
// kernel: gpt2_attention_forward.3
$region0: #{gpt2_attention_forward.3}
  #allocation0 [shape = 'u32[]', space=smem, size = 0x4, offset = 0x4, fixed_abs, tag = 'smem constant byte address 0x4 - core index']
  #allocation1 [shape = 'u32[72,128]{1,0:T(1,128)}', space=vmem, size = 0x9000, scoped, tag = 'internal scratch']
  #allocation2 [shape = 'f32[16,96]{1,0:T(8,128)}', space=vmem, size = 0x2000, scoped, tag = 'scratch operand']
  %s0 = inlined_call_operand.hbm [shape: f32[16,32], index: 0, kind: input, shape index: {}]
  %s1 = inlined_call_operand.hbm [shape: f32[32,96], index: 1, kind: input, shape index: {}]
  %s2 = inlined_call_operand.vmem [shape: f32[1,96], index: 2, kind: input, shape index: {}]
  %s3 = inlined_call_operand.vmem [shape: f32[16,96], index: 3, kind: output, shape index: {}]
  %s4 = sld [smem:[#allocation0]]
  $region38: #{gpt2_attention_forward.3} parent=0
    _
  %s6 = ssub.s32 1, %s4
  %s7 = scalar_select 0, %s6, %s4
  $region1: #{gpt2_attention_forward.3} parent=0
    #allocation3 [shape = 'u8[8192]{0}', space=vmem, size = 0x2000, scoped, tag = 'input window, operand 0, single buffered']
    #allocation4 [shape = 's32[1]{0}', space=sflag, size = 0x4, scoped, tag = 'scoped memory for gpt2_attention_forward.3']
    #allocation5 [shape = 'u8[16384]{0}', space=vmem, size = 0x4000, scoped, tag = 'input window, operand 1, single buffered']
    #allocation6 [shape = 's32[1]{0}', space=sflag, size = 0x4, scoped, tag = 'scoped memory for gpt2_attention_forward.3']
    %8 = vsyncpa [#allocation4], 0
    %9 = vsyncpa [#allocation6], 0
    // Predicated region
    $region2: #{gpt2_attention_forward.3} parent=1 // pred_check
      _
    $region3: #{gpt2_attention_forward.3} parent=1 // pred_check_branch
      %11 = sbr.rel (0) target = $region5
    $region4: #{gpt2_attention_forward.3} parent=1 // pred_region
      %13 = vsyncadd [#allocation4], 0
      %s14 = sshll.u32 %s0, 4
      %s15 = int_to_ptr.hbm [resolvable:$true] %s14
      %s16 = sshll.u32 [#allocation3], 4
      %s17 = int_to_ptr.vmem [resolvable:$true] %s16
      %22 = dma.hbm_to_vmem [thread:$0]  %s15, 256, %s17, [#allocation4], 128, 128, 8
    $region5: #{gpt2_attention_forward.3} parent=1 // pred_fallthru
      _
    // Predicated region
    $region6: #{gpt2_attention_forward.3} parent=1 // pred_check
      _
    $region7: #{gpt2_attention_forward.3} parent=1 // pred_check_branch
      %24 = sbr.rel (0) target = $region9
    $region8: #{gpt2_attention_forward.3} parent=1 // pred_region
      %26 = vsyncadd [#allocation6], 0
      %s27 = sshll.u32 %s1, 4
      %s28 = int_to_ptr.hbm [resolvable:$true] %s27
      %s29 = sshll.u32 [#allocation5], 4
      %s30 = int_to_ptr.vmem [resolvable:$true] %s29
      %35 = dma.hbm_to_vmem [thread:$0]  %s28, 512, %s30, [#allocation6], 128, 128, 8
    $region9: #{gpt2_attention_forward.3} parent=1 // pred_fallthru
      _
    // Predicated region
    $region10: #{gpt2_attention_forward.3} parent=1 // pred_check
      _
    $region11: #{gpt2_attention_forward.3} parent=1 // pred_check_branch
      %37 = sbr.rel (0) target = $region13
    $region12: #{gpt2_attention_forward.3} parent=1 // pred_region
      _
    $region13: #{gpt2_attention_forward.3} parent=1 // pred_fallthru
      _
    // Predicated region
    $region14: #{gpt2_attention_forward.3} parent=1 // pred_check
      _
    $region15: #{gpt2_attention_forward.3} parent=1 // pred_check_branch
      %39 = sbr.rel (0) target = $region17
    $region16: #{gpt2_attention_forward.3} parent=1 // pred_region
      %41 = dma.done [#allocation4], 256
    $region17: #{gpt2_attention_forward.3} parent=1 // pred_fallthru
      _
    // Predicated region
    $region18: #{gpt2_attention_forward.3} parent=1 // pred_check
      _
    $region19: #{gpt2_attention_forward.3} parent=1 // pred_check_branch
      %43 = sbr.rel (0) target = $region21
    $region20: #{gpt2_attention_forward.3} parent=1 // pred_region
      %45 = dma.done [#allocation6], 512
    $region21: #{gpt2_attention_forward.3} parent=1 // pred_fallthru
      _
    %p46 = scmp.eq.s32.totalorder 0, 0
    // Predicated region
    $region22: #{gpt2_attention_forward.3} parent=1 // pred_check
      %p47 = pneg %p46
    $region23: #{gpt2_attention_forward.3} parent=1 // pred_check_branch
      %49 = sbr.rel (%p47) target = $region25
    $region24: #{gpt2_attention_forward.3} parent=1 // pred_region
      %vm50 = vcmask 785408
      %51 = vst.msk [vmem:[#allocation2] sm:$0xff] %vm50, 0.0
      %52 = vst.msk [vmem:[#allocation2 + $0x8] sm:$0xff] %vm50, 0.0
    $region25: #{gpt2_attention_forward.3} parent=1 // pred_fallthru
      _
    %v53 = vld [vmem:[#allocation2] sm:$0xff]
    %v54 = vld [vmem:[#allocation2 + $0x8] sm:$0xff]
    %v55 = vld [vmem:[#allocation3] sm:$0xff]
    %v56 = vld [vmem:[#allocation3 + $0x8] sm:$0xff]
    %v57 = vld [vmem:[#allocation5] sm:$0xff]
    %v58 = vld [vmem:[#allocation5 + $0x8] sm:$0xff]
    %v59 = vld [vmem:[#allocation5 + $0x10] sm:$0xff]
    %v60 = vld [vmem:[#allocation5 + $0x18] sm:$0xff]
    %vm61 = vcmask 261120
    %v63 = vsel %vm61, %v55, 0
    %v66 = vsel %vm61, %v56, 0
    %68 = vmatpush.msra.mxu0 0.0
    %69 = vmatpush.msra.mxu0 0.0
    %70 = vmatpush.msra.mxu0 0.0
    %71 = vmatpush.msra.mxu0 0.0
    %72 = vmatpush.msra.mxu0 0.0
    %73 = vmatpush.msra.mxu0 0.0
    %74 = vmatpush.msra.mxu0 0.0
    %75 = vmatpush.msra.mxu0 0.0
    %76 = vmatpush.msra.mxu0 0.0
    %77 = vmatpush.msra.mxu0 0.0
    %78 = vmatpush.msra.mxu0 0.0
    %79 = vmatpush.msra.mxu0 0.0
    %80 = vmatpush.msra.mxu0 %v60
    %81 = vmatpush.msra.mxu0 %v59
    %82 = vmatpush.msra.mxu0 %v58
    %83 = vmatpush.msra.mxu0 %v57
    %84 = vmatmul.f32.gmra.mxu0 %v63
    %v85 = vpop.f32.mrf.mxu0
    %v86 = vadd.f32 0.0, %v85
    %87 = vmatmul.f32.gmra.mxu0 %v66
    %v88 = vpop.f32.mrf.mxu0
    %v89 = vadd.f32 0.0, %v88
    %90 = vdwg.mxu0
    %v91 = vadd.f32 %v53, %v86
    %v92 = vadd.f32 %v54, %v89
    %vm93 = vcmask 785408
    %94 = vst.msk [vmem:[#allocation2] sm:$0xff] %vm93, %v91
    %95 = vst.msk [vmem:[#allocation2 + $0x8] sm:$0xff] %vm93, %v92
    // Predicated region
    $region26: #{gpt2_attention_forward.3} parent=1 // pred_check
      %p96 = pneg %p46
    $region27: #{gpt2_attention_forward.3} parent=1 // pred_check_branch
      %98 = sbr.rel (%p96) target = $region29
    $region28: #{gpt2_attention_forward.3} parent=1 // pred_region
      %v99 = vld [vmem:[#allocation2] sm:$0xff]
      %v100 = vld [vmem:[#allocation2 + $0x8] sm:$0xff]
      %v101 = vld [vmem:[%s2] sm:$0x1]
      %v103 = vperm.slane %v101, 0
      %v105 = vadd.f32 %v99, %v103
      %v106 = vadd.f32 %v100, %v103
      %107 = vst.msk [vmem:[%s3] sm:$0xff] %vm93, %v105
      %108 = vst.msk [vmem:[%s3 + $0x8] sm:$0xff] %vm93, %v106
    $region29: #{gpt2_attention_forward.3} parent=1 // pred_fallthru
      _
    // Predicated region
    $region30: #{gpt2_attention_forward.3} parent=1 // pred_check
      _
    $region31: #{gpt2_attention_forward.3} parent=1 // pred_check_branch
      %110 = sbr.rel (0) target = $region33
    $region32: #{gpt2_attention_forward.3} parent=1 // pred_region
      _
    $region33: #{gpt2_attention_forward.3} parent=1 // pred_fallthru
      _
    // Predicated region
    $region34: #{gpt2_attention_forward.3} parent=1 // pred_check
      _
    $region35: #{gpt2_attention_forward.3} parent=1 // pred_check_branch
      %112 = sbr.rel (0) target = $region37
    $region36: #{gpt2_attention_forward.3} parent=1 // pred_region
      _
    $region37: #{gpt2_attention_forward.3} parent=1 // pred_fallthru
      _
    %113 = vsyncpa [#allocation4], 1
    %114 = vsyncpa [#allocation6], 1

// kernel: gpt2_attention_forward.4
$region0: #{gpt2_attention_forward.4}
  #allocation0 [shape = 'u32[]', space=smem, size = 0x4, offset = 0x4, fixed_abs, tag = 'smem constant byte address 0x4 - core index']
  #allocation1 [shape = 'u32[72,128]{1,0:T(1,128)}', space=vmem, size = 0x9000, scoped, tag = 'internal scratch']
  #allocation2 [shape = 'f32[8,1]{1,0:T(8,128)}', space=vmem, size = 0x1000, scoped, tag = 'scratch operand']
  #allocation3 [shape = 'f32[8,1]{1,0:T(8,128)}', space=vmem, size = 0x1000, scoped, tag = 'scratch operand']
  #allocation4 [shape = 'f32[8,8]{1,0:T(8,128)}', space=vmem, size = 0x1000, scoped, tag = 'scratch operand']
  %s0 = inlined_call_operand.vmem [shape: f32[2,4,8,8], index: 0, kind: input, shape index: {}]
  %s1 = inlined_call_operand.vmem [shape: f32[2,4,8,8], index: 1, kind: input, shape index: {}]
  %s2 = inlined_call_operand.vmem [shape: f32[2,4,8,8], index: 2, kind: input, shape index: {}]
  %s3 = inlined_call_operand.vmem [shape: f32[2,4,8,8], index: 3, kind: output, shape index: {}]
  %s4 = sld [smem:[#allocation0]]
  $region57: #{gpt2_attention_forward.4} parent=0
    _
  %s6 = ssub.s32 1, %s4
  %s7 = scalar_select 0, %s6, %s4
  loop: start=0, step=1, limit=10
  $region2: #{gpt2_attention_forward.4} parent=0 // loop_pre_header
    _
  $region3: #{gpt2_attention_forward.4} parent=0 // loop_header
    %s9 = sphi 0, %s13
    %p10 = scmp.ge.s32.totalorder %s9, 10
    %s16 = sphi 0, %s42
    %s17 = sphi 0, %s38
    %s18 = sphi 0, %s34
    %s19 = sphi 0, %s30
    %s20 = sphi 0, %s16
    %s21 = sphi 0, %s17
    %s22 = sphi 0, %s18
    %s23 = sphi 0, %s19
    %s24 = sphi 0, %s20
    %s25 = sphi 0, %s21
    %s26 = sphi 0, %s22
    %s27 = sphi 0, %s23
    %s49 = sphi 0, %s51
    %s52 = sphi 0, %s49
    %s53 = sphi 0, %s52
    %s69 = sphi 0, %s53
    %s79 = sphi 0, %s81
    %s82 = sphi 0, %s79
    %s83 = sphi 0, %s82
    %s99 = sphi 0, %s83
    %s109 = sphi 0, %s111
    %s112 = sphi 0, %s109
    %s113 = sphi 0, %s112
    %s129 = sphi 0, %s113
    %s139 = sphi 0, %s141
    %s142 = sphi 0, %s139
    %s143 = sphi 0, %s142
    %s159 = sphi 0, %s143
  $region4: #{gpt2_attention_forward.4} parent=0 // loop_header_branch
    %12 = sbr.rel (%p10) target = $region8
  $region5: #{gpt2_attention_forward.4} parent=0 // loop_body
    %s14 = ssub.s32 %s9, 1
    %s15 = ssub.s32 %s9, 2
    %s28 = sadd.s32 1, %s19
    %p29 = scmp.ge.s32.totalorder %s28, 1
    %s30 = scalar_select %p29, 0, %s28
    %s31 = sadd.s32 1, %s18
    %s32 = scalar_select %p29, %s31, %s18
    %p33 = scmp.ge.s32.totalorder %s32, 1
    %s34 = scalar_select %p33, 0, %s32
    %s35 = sadd.s32 1, %s17
    %s36 = scalar_select %p33, %s35, %s17
    %p37 = scmp.ge.s32.totalorder %s36, 4
    %s38 = scalar_select %p37, 0, %s36
    %s39 = sadd.s32 1, %s16
    %s40 = scalar_select %p37, %s39, %s16
    %p41 = scmp.ge.s32.totalorder %s40, 2
    %s42 = scalar_select %p41, 0, %s40
    %s43 = ssub.s32 %s16, %s42
    %s44 = ssub.s32 %s17, %s38
    %s45 = sor.u32 %s43, %s44
    %s46 = ssub.s32 %s18, %s34
    %s47 = sor.u32 %s45, %s46
    %p48 = scmp.eq.s32.totalorder %s47, 0
    %s50 = sadd.s32 %s49, 1
    %s51 = scalar_select %p48, %s49, %s50
    %p54 = pneg %p48
    %p55 = scmp.eq.s32.totalorder %s9, 7
    %p56 = por %p54, %p55
    %p57 = scmp.ne.s32.totalorder %s49, %s52
    %p58 = scmp.eq.s32.totalorder %s9, 0
    %p59 = por %p57, %p58
    %p60 = scmp.ne.s32.totalorder %s49, %s52
    %p61 = scmp.eq.s32.totalorder %s14, 7
    %p62 = por %p60, %p61
    %p63 = scmp.ne.s32.totalorder %s52, %s53
    %p64 = scmp.eq.s32.totalorder %s14, 0
    %p65 = por %p63, %p64
    %p66 = scmp.ne.s32.totalorder %s52, %s53
    %p67 = scmp.eq.s32.totalorder %s15, 7
    %p68 = por %p66, %p67
    %p70 = scmp.ne.s32.totalorder %s53, %s69
    %p71 = scmp.eq.s32.totalorder %s15, 0
    %p72 = por %p70, %p71
    %s73 = ssub.s32 %s16, %s42
    %s74 = ssub.s32 %s17, %s38
    %s75 = sor.u32 %s73, %s74
    %s76 = ssub.s32 %s19, %s30
    %s77 = sor.u32 %s75, %s76
    %p78 = scmp.eq.s32.totalorder %s77, 0
    %s80 = sadd.s32 %s79, 1
    %s81 = scalar_select %p78, %s79, %s80
    %p84 = pneg %p78
    %p85 = scmp.eq.s32.totalorder %s9, 7
    %p86 = por %p84, %p85
    %p87 = scmp.ne.s32.totalorder %s79, %s82
    %p88 = scmp.eq.s32.totalorder %s9, 0
    %p89 = por %p87, %p88
    %p90 = scmp.ne.s32.totalorder %s79, %s82
    %p91 = scmp.eq.s32.totalorder %s14, 7
    %p92 = por %p90, %p91
    %p93 = scmp.ne.s32.totalorder %s82, %s83
    %p94 = scmp.eq.s32.totalorder %s14, 0
    %p95 = por %p93, %p94
    %p96 = scmp.ne.s32.totalorder %s82, %s83
    %p97 = scmp.eq.s32.totalorder %s15, 7
    %p98 = por %p96, %p97
    %p100 = scmp.ne.s32.totalorder %s83, %s99
    %p101 = scmp.eq.s32.totalorder %s15, 0
    %p102 = por %p100, %p101
    %s103 = ssub.s32 %s16, %s42
    %s104 = ssub.s32 %s17, %s38
    %s105 = sor.u32 %s103, %s104
    %s106 = ssub.s32 %s19, %s30
    %s107 = sor.u32 %s105, %s106
    %p108 = scmp.eq.s32.totalorder %s107, 0
    %s110 = sadd.s32 %s109, 1
    %s111 = scalar_select %p108, %s109, %s110
    %p114 = pneg %p108
    %p115 = scmp.eq.s32.totalorder %s9, 7
    %p116 = por %p114, %p115
    %p117 = scmp.ne.s32.totalorder %s109, %s112
    %p118 = scmp.eq.s32.totalorder %s9, 0
    %p119 = por %p117, %p118
    %p120 = scmp.ne.s32.totalorder %s109, %s112
    %p121 = scmp.eq.s32.totalorder %s14, 7
    %p122 = por %p120, %p121
    %p123 = scmp.ne.s32.totalorder %s112, %s113
    %p124 = scmp.eq.s32.totalorder %s14, 0
    %p125 = por %p123, %p124
    %p126 = scmp.ne.s32.totalorder %s112, %s113
    %p127 = scmp.eq.s32.totalorder %s15, 7
    %p128 = por %p126, %p127
    %p130 = scmp.ne.s32.totalorder %s113, %s129
    %p131 = scmp.eq.s32.totalorder %s15, 0
    %p132 = por %p130, %p131
    %s133 = ssub.s32 %s16, %s42
    %s134 = ssub.s32 %s17, %s38
    %s135 = sor.u32 %s133, %s134
    %s136 = ssub.s32 %s18, %s34
    %s137 = sor.u32 %s135, %s136
    %p138 = scmp.eq.s32.totalorder %s137, 0
    %s140 = sadd.s32 %s139, 1
    %s141 = scalar_select %p138, %s139, %s140
    %p144 = pneg %p138
    %p145 = scmp.eq.s32.totalorder %s9, 7
    %p146 = por %p144, %p145
    %p147 = scmp.ne.s32.totalorder %s139, %s142
    %p148 = scmp.eq.s32.totalorder %s9, 0
    %p149 = por %p147, %p148
    %p150 = scmp.ne.s32.totalorder %s139, %s142
    %p151 = scmp.eq.s32.totalorder %s14, 7
    %p152 = por %p150, %p151
    %p153 = scmp.ne.s32.totalorder %s142, %s143
    %p154 = scmp.eq.s32.totalorder %s14, 0
    %p155 = por %p153, %p154
    %p156 = scmp.ne.s32.totalorder %s142, %s143
    %p157 = scmp.eq.s32.totalorder %s15, 7
    %p158 = por %p156, %p157
    %p160 = scmp.ne.s32.totalorder %s143, %s159
    %p161 = scmp.eq.s32.totalorder %s15, 0
    %p162 = por %p160, %p161
    %p163 = scmp.le.s32.totalorder 1, %s9
    %p164 = scmp.lt.s32.totalorder %s9, 9
    %p165 = pnand %p163, %p164
    %p166 = pneg %p165
    // Predicated region
    $region9: #{gpt2_attention_forward.4} parent=5 // pred_check
      _
    $region10: #{gpt2_attention_forward.4} parent=5 // pred_check_branch
      %168 = sbr.rel (%p165) target = $region12
    $region11: #{gpt2_attention_forward.4} parent=5 // pred_region
      %s169 = ssub.s32 %s9, 1
    $region12: #{gpt2_attention_forward.4} parent=5 // pred_fallthru
      _
    %p170 = scmp.lt.s32.totalorder %s9, 8
    // Predicated region
    $region13: #{gpt2_attention_forward.4} parent=5 // pred_check
      %p171 = pneg %p170
    $region14: #{gpt2_attention_forward.4} parent=5 // pred_check_branch
      %173 = sbr.rel (%p171) target = $region16
    $region15: #{gpt2_attention_forward.4} parent=5 // pred_region
      // Predicated region
      $region17: #{gpt2_attention_forward.4} parent=15 // pred_check
        %p174 = pneg %p59
      $region18: #{gpt2_attention_forward.4} parent=15 // pred_check_branch
        %176 = sbr.rel (%p174) target = $region20
      $region19: #{gpt2_attention_forward.4} parent=15 // pred_region
        %p177 = scmp.lt.s32.totalorder %s16, 1
        %s178 = scalar_select %p177, %s16, 1
        %p179 = scmp.lt.s32.totalorder %s17, 3
        %s180 = scalar_select %p179, %s17, 3
        %p181 = scmp.lt.s32.totalorder %s18, 0
        %s182 = scalar_select %p181, %s18, 0
        %s183 = sadd.s32 %s182, %s180
        %s184 = smul.addr %s178, 4
        %s185 = sadd.s32 %s183, %s184
        %s186 = smul.addr %s185, 8
        %s187 = scalar_lea.vmem %s0, %s186
      $region20: #{gpt2_attention_forward.4} parent=15 // pred_fallthru
        _
      // Predicated region
      $region21: #{gpt2_attention_forward.4} parent=15 // pred_check
        %p188 = pneg %p89
      $region22: #{gpt2_attention_forward.4} parent=15 // pred_check_branch
        %190 = sbr.rel (%p188) target = $region24
      $region23: #{gpt2_attention_forward.4} parent=15 // pred_region
        %p191 = scmp.lt.s32.totalorder %s16, 1
        %s192 = scalar_select %p191, %s16, 1
        %p193 = scmp.lt.s32.totalorder %s17, 3
        %s194 = scalar_select %p193, %s17, 3
        %p195 = scmp.lt.s32.totalorder %s19, 0
        %s196 = scalar_select %p195, %s19, 0
        %s197 = sadd.s32 %s196, %s194
        %s198 = smul.addr %s192, 4
        %s199 = sadd.s32 %s197, %s198
        %s200 = smul.addr %s199, 8
        %s201 = scalar_lea.vmem %s1, %s200
      $region24: #{gpt2_attention_forward.4} parent=15 // pred_fallthru
        _
      // Predicated region
      $region25: #{gpt2_attention_forward.4} parent=15 // pred_check
        %p202 = pneg %p119
      $region26: #{gpt2_attention_forward.4} parent=15 // pred_check_branch
        %204 = sbr.rel (%p202) target = $region28
      $region27: #{gpt2_attention_forward.4} parent=15 // pred_region
        %p205 = scmp.lt.s32.totalorder %s16, 1
        %s206 = scalar_select %p205, %s16, 1
        %p207 = scmp.lt.s32.totalorder %s17, 3
        %s208 = scalar_select %p207, %s17, 3
        %p209 = scmp.lt.s32.totalorder %s19, 0
        %s210 = scalar_select %p209, %s19, 0
        %s211 = sadd.s32 %s210, %s208
        %s212 = smul.addr %s206, 4
        %s213 = sadd.s32 %s211, %s212
        %s214 = smul.addr %s213, 8
        %s215 = scalar_lea.vmem %s2, %s214
      $region28: #{gpt2_attention_forward.4} parent=15 // pred_fallthru
        _
    $region16: #{gpt2_attention_forward.4} parent=5 // pred_fallthru
      _
    %p216 = scmp.le.s32.totalorder 1, %s9
    %p217 = scmp.lt.s32.totalorder %s9, 9
    %p218 = pnand %p216, %p217
    %p219 = pneg %p218
    // Predicated region
    $region29: #{gpt2_attention_forward.4} parent=5 // pred_check
      _
    $region30: #{gpt2_attention_forward.4} parent=5 // pred_check_branch
      %221 = sbr.rel (%p218) target = $region32
    $region31: #{gpt2_attention_forward.4} parent=5 // pred_region
      %s222 = ssub.s32 %s9, 1
      %p223 = scmp.lt.s32.totalorder %s20, 1
      %s224 = scalar_select %p223, %s20, 1
      %p225 = scmp.lt.s32.totalorder %s21, 3
      %s226 = scalar_select %p225, %s21, 3
      %p227 = scmp.lt.s32.totalorder %s22, 0
      %s228 = scalar_select %p227, %s22, 0
      %s229 = sadd.s32 %s228, %s226
      %s230 = smul.addr %s224, 4
      %s231 = sadd.s32 %s229, %s230
      %s232 = smul.addr %s231, 8
      %s233 = scalar_lea.vmem %s0, %s232
      %p234 = pneg %p65
      %p235 = pneg %p62
      %p236 = scmp.lt.s32.totalorder %s20, 1
      %s237 = scalar_select %p236, %s20, 1
      %p238 = scmp.lt.s32.totalorder %s21, 3
      %s239 = scalar_select %p238, %s21, 3
      %p240 = scmp.lt.s32.totalorder %s23, 0
      %s241 = scalar_select %p240, %s23, 0
      %s242 = sadd.s32 %s241, %s239
      %s243 = smul.addr %s237, 4
      %s244 = sadd.s32 %s242, %s243
      %s245 = smul.addr %s244, 8
      %s246 = scalar_lea.vmem %s1, %s245
      %p247 = pneg %p95
      %p248 = pneg %p92
      %p249 = scmp.lt.s32.totalorder %s20, 1
      %s250 = scalar_select %p249, %s20, 1
      %p251 = scmp.lt.s32.totalorder %s21, 3
      %s252 = scalar_select %p251, %s21, 3
      %p253 = scmp.lt.s32.totalorder %s23, 0
      %s254 = scalar_select %p253, %s23, 0
      %s255 = sadd.s32 %s254, %s252
      %s256 = smul.addr %s250, 4
      %s257 = sadd.s32 %s255, %s256
      %s258 = smul.addr %s257, 8
      %s259 = scalar_lea.vmem %s2, %s258
      %p260 = pneg %p125
      %p261 = pneg %p122
      %p262 = pneg %p155
      %p263 = pneg %p152
      %p264 = scmp.lt.s32.totalorder %s20, 1
      %s265 = scalar_select %p264, %s20, 1
      %p266 = scmp.lt.s32.totalorder %s21, 3
      %s267 = scalar_select %p266, %s21, 3
      %p268 = scmp.lt.s32.totalorder %s22, 0
      %s269 = scalar_select %p268, %s22, 0
      %s270 = sadd.s32 %s269, %s267
      %s271 = smul.addr %s265, 4
      %s272 = sadd.s32 %s270, %s271
      %s273 = smul.addr %s272, 8
      %s274 = scalar_lea.vmem %s3, %s273
      %p275 = scmp.lt.s32.totalorder %s20, 1
      %s276 = scalar_select %p275, %s20, 1
      %p277 = scmp.lt.s32.totalorder %s21, 3
      %s278 = scalar_select %p277, %s21, 3
      %p279 = scmp.lt.s32.totalorder %s22, 0
      %s280 = scalar_select %p279, %s22, 0
      %s281 = sadd.s32 %s280, %s278
      %s282 = smul.addr %s276, 4
      %s283 = sadd.s32 %s281, %s282
      %s284 = smul.addr %s283, 8
      %s285 = scalar_lea.vmem %s0, %s284
      %p286 = scmp.lt.s32.totalorder %s20, 1
      %s287 = scalar_select %p286, %s20, 1
      %p288 = scmp.lt.s32.totalorder %s21, 3
      %s289 = scalar_select %p288, %s21, 3
      %p290 = scmp.lt.s32.totalorder %s23, 0
      %s291 = scalar_select %p290, %s23, 0
      %s292 = sadd.s32 %s291, %s289
      %s293 = smul.addr %s287, 4
      %s294 = sadd.s32 %s292, %s293
      %s295 = smul.addr %s294, 8
      %s296 = scalar_lea.vmem %s1, %s295
      %p297 = scmp.lt.s32.totalorder %s20, 1
      %s298 = scalar_select %p297, %s20, 1
      %p299 = scmp.lt.s32.totalorder %s21, 3
      %s300 = scalar_select %p299, %s21, 3
      %p301 = scmp.lt.s32.totalorder %s23, 0
      %s302 = scalar_select %p301, %s23, 0
      %s303 = sadd.s32 %s302, %s300
      %s304 = smul.addr %s298, 4
      %s305 = sadd.s32 %s303, %s304
      %s306 = smul.addr %s305, 8
      %s307 = scalar_lea.vmem %s2, %s306
      %p308 = scmp.lt.s32.totalorder %s20, 1
      %s309 = scalar_select %p308, %s20, 1
      %p310 = scmp.lt.s32.totalorder %s21, 3
      %s311 = scalar_select %p310, %s21, 3
      %p312 = scmp.lt.s32.totalorder %s22, 0
      %s313 = scalar_select %p312, %s22, 0
      %s314 = sadd.s32 %s313, %s311
      %s315 = smul.addr %s309, 4
      %s316 = sadd.s32 %s314, %s315
      %s317 = smul.addr %s316, 8
      %s318 = scalar_lea.vmem %s3, %s317
      %p319 = scmp.eq.s32.totalorder %s23, 0
      // Predicated region
      $region33: #{gpt2_attention_forward.4} parent=31 // pred_check
        %p320 = pneg %p319
      $region34: #{gpt2_attention_forward.4} parent=31 // pred_check_branch
        %322 = sbr.rel (%p320) target = $region36
      $region35: #{gpt2_attention_forward.4} parent=31 // pred_region
        %vm323 = vcmask 7168
        %324 = vst.msk [vmem:[#allocation2] sm:$0xff] %vm323, -inf
        %325 = vst.msk [vmem:[#allocation3] sm:$0xff] %vm323, 0.0
        %vm326 = vcmask 64512
        %327 = vst.msk [vmem:[#allocation4] sm:$0xff] %vm326, 0.0
      $region36: #{gpt2_attention_forward.4} parent=31 // pred_fallthru
        _
      %s328 = smul.u32 %s23, 8
      %s329 = smul.u32 %s22, 8
      %s330 = sadd.s32 %s329, 7
      %p331 = scmp.le.s32.totalorder %s328, %s330
      // Predicated region
      $region37: #{gpt2_attention_forward.4} parent=31 // pred_check
        %p332 = pneg %p331
      $region38: #{gpt2_attention_forward.4} parent=31 // pred_check_branch
        %334 = sbr.rel (%p332) target = $region40
      $region39: #{gpt2_attention_forward.4} parent=31 // pred_region
        %v335 = vld [vmem:[%s285] sm:$0xff]
        %v336 = vmul.f32 %v335, 0.35355338
        %v337 = vld [vmem:[%s296] sm:$0xff]
        %v338 = vld [vmem:[%s307] sm:$0xff]
        %vm339 = vcmask 64512
        %v341 = vsel %vm339, %v336, 0
        %v344 = vsel %vm339, %v337, 0
        %346 = vmatpush.xpose.msra.mxu0 0.0
        %347 = vmatpush.xpose.msra.mxu0 0.0
        %348 = vmatpush.xpose.msra.mxu0 0.0
        %349 = vmatpush.xpose.msra.mxu0 0.0
        %350 = vmatpush.xpose.msra.mxu0 0.0
        %351 = vmatpush.xpose.msra.mxu0 0.0
        %352 = vmatpush.xpose.msra.mxu0 0.0
        %353 = vmatpush.xpose.msra.mxu0 0.0
        %354 = vmatpush.xpose.msra.mxu0 0.0
        %355 = vmatpush.xpose.msra.mxu0 0.0
        %356 = vmatpush.xpose.msra.mxu0 0.0
        %357 = vmatpush.xpose.msra.mxu0 0.0
        %358 = vmatpush.xpose.msra.mxu0 0.0
        %359 = vmatpush.xpose.msra.mxu0 0.0
        %360 = vmatpush.xpose.msra.mxu0 0.0
        %361 = vmatpush.xpose.msra.mxu0 %v344
        %362 = vmatmul.f32.gmra.mxu0 %v341
        %v363 = vpop.f32.mrf.mxu0
        %v364 = vadd.f32 0.0, %v363
        %365 = vdwg.mxu0
        %v366 = vlaneseq
        %v367 = vshrl.u32 %v366, 7
        %v368 = vstv %s329
        %v369 = vadd.s32 %v368, %v367
        %v370 = vlaneseq
        %v371 = vand.u32 %v370, 127
        %v372 = vstv %s328
        %v373 = vadd.s32 %v372, %v371
        %vm374 = vcmp.le.s32.totalorder %v373, %v369
        %v375 = vsel %vm374, %v364, -3.4028235e+38
        %v376 = vld [vmem:[#allocation2] sm:$0xff]
        %v377 = vsel %vm339, %v375, -inf
        %378 = vmax.xlane.f32.xlu0 %v377
        %v379 = vpop.xlane.xlu0 %378
        %v380 = vmax.f32 %v376, %v379
        %v381 = vsub.f32 %v376, %v380
        %v382 = vmul.f32 %v381, 1.442695
        %v383 = vpow.pop %v382
        %385 = vset.pattern.permute.xlu0 0
        %386 = vperm.xlu0 %385, %v380
        %v387 = vpop.permute.xlu0 %386
        %v389 = vsub.f32 %v375, %v387
        %v390 = vmul.f32 %v389, 1.442695
        %v391 = vpow.pop %v390
        %v392 = vld [vmem:[#allocation3] sm:$0xff]
        %v393 = vmul.f32 %v383, %v392
        %v394 = vsel %vm339, %v391, 0.0
        %395 = vadd.xlane.f32.xlu0 %v394
        %v396 = vpop.xlane.xlu0 %395
        %v397 = vadd.f32 %v393, %v396
        %vm398 = vcmask 7168
        %399 = vst.msk [vmem:[#allocation3] sm:$0xff] %vm398, %v397
        %v400 = vld [vmem:[#allocation4] sm:$0xff]
        %402 = vset.pattern.permute.xlu0 0
        %403 = vperm.xlu0 %402, %v383
        %v404 = vpop.permute.xlu0 %403
        %v406 = vmul.f32 %v404, %v400
        %v408 = vsel %vm339, %v391, 0
        %410 = vmatpush.msra.mxu0 0.0
        %411 = vmatpush.msra.mxu0 0.0
        %412 = vmatpush.msra.mxu0 0.0
        %413 = vmatpush.msra.mxu0 0.0
        %414 = vmatpush.msra.mxu0 0.0
        %415 = vmatpush.msra.mxu0 0.0
        %416 = vmatpush.msra.mxu0 0.0
        %417 = vmatpush.msra.mxu0 0.0
        %418 = vmatpush.msra.mxu0 0.0
        %419 = vmatpush.msra.mxu0 0.0
        %420 = vmatpush.msra.mxu0 0.0
        %421 = vmatpush.msra.mxu0 0.0
        %422 = vmatpush.msra.mxu0 0.0
        %423 = vmatpush.msra.mxu0 0.0
        %424 = vmatpush.msra.mxu0 0.0
        %425 = vmatpush.msra.mxu0 %v338
        %426 = vmatmul.f32.gmra.mxu0 %v408
        %v427 = vpop.f32.mrf.mxu0
        %v428 = vadd.f32 0.0, %v427
        %429 = vdwg.mxu0
        %v430 = vadd.f32 %v406, %v428
        %431 = vst.msk [vmem:[#allocation4] sm:$0xff] %vm339, %v430
        %432 = vst.msk [vmem:[#allocation2] sm:$0xff] %vm398, %v380
      $region40: #{gpt2_attention_forward.4} parent=31 // pred_fallthru
        _
      // Predicated region
      $region41: #{gpt2_attention_forward.4} parent=31 // pred_check
        %p433 = pneg %p319
      $region42: #{gpt2_attention_forward.4} parent=31 // pred_check_branch
        %435 = sbr.rel (%p433) target = $region44
      $region43: #{gpt2_attention_forward.4} parent=31 // pred_region
        %v436 = vld [vmem:[#allocation4] sm:$0xff]
        %v437 = vld [vmem:[#allocation3] sm:$0xff]
        %v438 = vrcp.pop %v437
        %440 = vset.pattern.permute.xlu0 0
        %441 = vperm.xlu0 %440, %v438
        %v442 = vpop.permute.xlu0 %441
        %v444 = vmul.f32 %v436, %v442
        %vm445 = vcmask 64512
        %446 = vst.msk [vmem:[%s318] sm:$0xff] %vm445, %v444
      $region44: #{gpt2_attention_forward.4} parent=31 // pred_fallthru
        _
      %p447 = scmp.lt.s32.totalorder %s20, 1
      %s448 = scalar_select %p447, %s20, 1
      %p449 = scmp.lt.s32.totalorder %s21, 3
      %s450 = scalar_select %p449, %s21, 3
      %p451 = scmp.lt.s32.totalorder %s22, 0
      %s452 = scalar_select %p451, %s22, 0
      %s453 = sadd.s32 %s452, %s450
      %s454 = smul.addr %s448, 4
      %s455 = sadd.s32 %s453, %s454
      %s456 = smul.addr %s455, 8
      %s457 = scalar_lea.vmem %s3, %s456
      // Predicated region
      $region45: #{gpt2_attention_forward.4} parent=31 // pred_check
        %p458 = pneg %p152
      $region46: #{gpt2_attention_forward.4} parent=31 // pred_check_branch
        %460 = sbr.rel (%p458) target = $region48
      $region47: #{gpt2_attention_forward.4} parent=31 // pred_region
        _
      $region48: #{gpt2_attention_forward.4} parent=31 // pred_fallthru
        _
    $region32: #{gpt2_attention_forward.4} parent=5 // pred_fallthru
      _
    %p461 = scmp.le.s32.totalorder 2, %s9
    // Predicated region
    $region49: #{gpt2_attention_forward.4} parent=5 // pred_check
      %p462 = pneg %p461
    $region50: #{gpt2_attention_forward.4} parent=5 // pred_check_branch
      %464 = sbr.rel (%p462) target = $region52
    $region51: #{gpt2_attention_forward.4} parent=5 // pred_region
      %s465 = ssub.s32 %s9, 2
      // Predicated region
      $region53: #{gpt2_attention_forward.4} parent=51 // pred_check
        %p466 = pneg %p158
      $region54: #{gpt2_attention_forward.4} parent=51 // pred_check_branch
        %468 = sbr.rel (%p466) target = $region56
      $region55: #{gpt2_attention_forward.4} parent=51 // pred_region
        %p469 = scmp.lt.s32.totalorder %s24, 1
        %s470 = scalar_select %p469, %s24, 1
        %p471 = scmp.lt.s32.totalorder %s25, 3
        %s472 = scalar_select %p471, %s25, 3
        %p473 = scmp.lt.s32.totalorder %s26, 0
        %s474 = scalar_select %p473, %s26, 0
        %s475 = sadd.s32 %s474, %s472
        %s476 = smul.addr %s470, 4
        %s477 = sadd.s32 %s475, %s476
        %s478 = smul.addr %s477, 8
        %s479 = scalar_lea.vmem %s3, %s478
      $region56: #{gpt2_attention_forward.4} parent=51 // pred_fallthru
        _
    $region52: #{gpt2_attention_forward.4} parent=5 // pred_fallthru
      _
  $region6: #{gpt2_attention_forward.4} parent=0 // loop_footer
    %s13 = sadd.s32 1, %s9
  $region7: #{gpt2_attention_forward.4} parent=0 // loop_footer_branch
    %8 = sbr.rel target = $region3
  $region8: #{gpt2_attention_forward.4} parent=0 // loop_exit
    _

// kernel: gpt2_attention_forward.5
$region0: #{gpt2_attention_forward.5}
  #allocation0 [shape = 'u32[]', space=smem, size = 0x4, offset = 0x4, fixed_abs, tag = 'smem constant byte address 0x4 - core index']
  #allocation1 [shape = 'u32[72,128]{1,0:T(1,128)}', space=vmem, size = 0x9000, scoped, tag = 'internal scratch']
  #allocation2 [shape = 'f32[16,32]{1,0:T(8,128)}', space=vmem, size = 0x2000, scoped, tag = 'scratch operand']
  %s0 = inlined_call_operand.vmem [shape: f32[16,32], index: 0, kind: input, shape index: {}]
  %s1 = inlined_call_operand.vmem [shape: f32[32,32], index: 1, kind: input, shape index: {}]
  %s2 = inlined_call_operand.vmem [shape: f32[1,32], index: 2, kind: input, shape index: {}]
  %s3 = inlined_call_operand.hbm [shape: f32[16,32], index: 3, kind: output, shape index: {}]
  %s4 = sld [smem:[#allocation0]]
  $region30: #{gpt2_attention_forward.5} parent=0
    _
  %s6 = ssub.s32 1, %s4
  %s7 = scalar_select 0, %s6, %s4
  $region1: #{gpt2_attention_forward.5} parent=0
    #allocation3 [shape = 'u8[8192]{0}', space=vmem, size = 0x2000, scoped, tag = 'output window, operand 0, single buffered']
    #allocation4 [shape = 's32[1]{0}', space=sflag, size = 0x4, scoped, tag = 'scoped memory for gpt2_attention_forward.5']
    %8 = vsyncpa [#allocation4], 0
    // Predicated region
    $region2: #{gpt2_attention_forward.5} parent=1 // pred_check
      _
    $region3: #{gpt2_attention_forward.5} parent=1 // pred_check_branch
      %10 = sbr.rel (0) target = $region5
    $region4: #{gpt2_attention_forward.5} parent=1 // pred_region
      _
    $region5: #{gpt2_attention_forward.5} parent=1 // pred_fallthru
      _
    // Predicated region
    $region6: #{gpt2_attention_forward.5} parent=1 // pred_check
      _
    $region7: #{gpt2_attention_forward.5} parent=1 // pred_check_branch
      %12 = sbr.rel (0) target = $region9
    $region8: #{gpt2_attention_forward.5} parent=1 // pred_region
      _
    $region9: #{gpt2_attention_forward.5} parent=1 // pred_fallthru
      _
    // Predicated region
    $region10: #{gpt2_attention_forward.5} parent=1 // pred_check
      _
    $region11: #{gpt2_attention_forward.5} parent=1 // pred_check_branch
      %14 = sbr.rel (0) target = $region13
    $region12: #{gpt2_attention_forward.5} parent=1 // pred_region
      _
    $region13: #{gpt2_attention_forward.5} parent=1 // pred_fallthru
      _
    %p15 = scmp.eq.s32.totalorder 0, 0
    // Predicated region
    $region14: #{gpt2_attention_forward.5} parent=1 // pred_check
      %p16 = pneg %p15
    $region15: #{gpt2_attention_forward.5} parent=1 // pred_check_branch
      %18 = sbr.rel (%p16) target = $region17
    $region16: #{gpt2_attention_forward.5} parent=1 // pred_region
      %vm19 = vcmask 261120
      %20 = vst.msk [vmem:[#allocation2] sm:$0xff] %vm19, 0.0
      %21 = vst.msk [vmem:[#allocation2 + $0x8] sm:$0xff] %vm19, 0.0
    $region17: #{gpt2_attention_forward.5} parent=1 // pred_fallthru
      _
    %v22 = vld [vmem:[#allocation2] sm:$0xff]
    %v23 = vld [vmem:[#allocation2 + $0x8] sm:$0xff]
    %v24 = vld [vmem:[%s0] sm:$0xff]
    %v25 = vld [vmem:[%s0 + $0x8] sm:$0xff]
    %v26 = vld [vmem:[%s1] sm:$0xff]
    %v27 = vld [vmem:[%s1 + $0x8] sm:$0xff]
    %v28 = vld [vmem:[%s1 + $0x10] sm:$0xff]
    %v29 = vld [vmem:[%s1 + $0x18] sm:$0xff]
    %vm30 = vcmask 261120
    %v32 = vsel %vm30, %v24, 0
    %v35 = vsel %vm30, %v25, 0
    %37 = vmatpush.msra.mxu0 0.0
    %38 = vmatpush.msra.mxu0 0.0
    %39 = vmatpush.msra.mxu0 0.0
    %40 = vmatpush.msra.mxu0 0.0
    %41 = vmatpush.msra.mxu0 0.0
    %42 = vmatpush.msra.mxu0 0.0
    %43 = vmatpush.msra.mxu0 0.0
    %44 = vmatpush.msra.mxu0 0.0
    %45 = vmatpush.msra.mxu0 0.0
    %46 = vmatpush.msra.mxu0 0.0
    %47 = vmatpush.msra.mxu0 0.0
    %48 = vmatpush.msra.mxu0 0.0
    %49 = vmatpush.msra.mxu0 %v29
    %50 = vmatpush.msra.mxu0 %v28
    %51 = vmatpush.msra.mxu0 %v27
    %52 = vmatpush.msra.mxu0 %v26
    %53 = vmatmul.f32.gmra.mxu0 %v32
    %v54 = vpop.f32.mrf.mxu0
    %v55 = vadd.f32 0.0, %v54
    %56 = vmatmul.f32.gmra.mxu0 %v35
    %v57 = vpop.f32.mrf.mxu0
    %v58 = vadd.f32 0.0, %v57
    %59 = vdwg.mxu0
    %v60 = vadd.f32 %v22, %v55
    %v61 = vadd.f32 %v23, %v58
    %62 = vst.msk [vmem:[#allocation2] sm:$0xff] %vm30, %v60
    %63 = vst.msk [vmem:[#allocation2 + $0x8] sm:$0xff] %vm30, %v61
    // Predicated region
    $region18: #{gpt2_attention_forward.5} parent=1 // pred_check
      %p64 = pneg %p15
    $region19: #{gpt2_attention_forward.5} parent=1 // pred_check_branch
      %66 = sbr.rel (%p64) target = $region21
    $region20: #{gpt2_attention_forward.5} parent=1 // pred_region
      %v67 = vld [vmem:[#allocation2] sm:$0xff]
      %v68 = vld [vmem:[#allocation2 + $0x8] sm:$0xff]
      %v69 = vld [vmem:[%s2] sm:$0x1]
      %v71 = vperm.slane %v69, 0
      %v73 = vadd.f32 %v67, %v71
      %v74 = vadd.f32 %v68, %v71
      %75 = vst.msk [vmem:[#allocation3] sm:$0xff] %vm30, %v73
      %76 = vst.msk [vmem:[#allocation3 + $0x8] sm:$0xff] %vm30, %v74
    $region21: #{gpt2_attention_forward.5} parent=1 // pred_fallthru
      _
    // Predicated region
    $region22: #{gpt2_attention_forward.5} parent=1 // pred_check
      _
    $region23: #{gpt2_attention_forward.5} parent=1 // pred_check_branch
      %78 = sbr.rel (0) target = $region25
    $region24: #{gpt2_attention_forward.5} parent=1 // pred_region
      %80 = vsyncadd [#allocation4], 0
      %s81 = sshll.u32 [#allocation3], 4
      %s82 = int_to_ptr.vmem [resolvable:$true] %s81
      %s83 = sshll.u32 %s3, 4
      %s84 = int_to_ptr.hbm [resolvable:$true] %s83
      %89 = dma.vmem_to_hbm [thread:$0]  %s82, 256, %s84, [#allocation4], 128, 128, 8
    $region25: #{gpt2_attention_forward.5} parent=1 // pred_fallthru
      _
    // Predicated region
    $region26: #{gpt2_attention_forward.5} parent=1 // pred_check
      _
    $region27: #{gpt2_attention_forward.5} parent=1 // pred_check_branch
      %91 = sbr.rel (0) target = $region29
    $region28: #{gpt2_attention_forward.5} parent=1 // pred_region
      %93 = dma.done [#allocation4], 256
    $region29: #{gpt2_attention_forward.5} parent=1 // pred_fallthru
      _
    %94 = vsyncpa [#allocation4], 1

</llo_original>
